<compile_context>
chip_gen: v6e
topology: v6e:2x2x1
jax: 0.10.0
libtpu: 0.0.40
codegen_flags: <defaults>
</compile_context>

<pallas_src>
import functools

import jax
import jax.numpy as jnp
from jax.experimental import pallas as pl
from jax.experimental.pallas import tpu as pltpu


def _round_up(x, m):
    return ((x + m - 1) // m) * m


def _padded_tile_bytes(rows, cols, itemsize):
    """VMEM bytes for a (rows, cols) buffer after (sublane, lane) padding."""
    sub = {4: 8, 2: 16, 1: 32}.get(int(itemsize), 8)
    return (_round_up(max(int(rows), 1), sub)
            * _round_up(max(int(cols), 1), 128) * int(itemsize))


# ----------------------------- Pallas kernel --------------------------------

def _adda_kernel(*refs, num_fields, vocab_size, use_onehot, has_num,
                 num_on_vpu, matmul_dtype, clf_is_scalar):
    """Fused embedding(one-hot matmul or dense) + ReLU MLP + clf + sigmoid.

    Refs (onehot path, has_num):
      cat: (TM, F) i32, num: (TM, Nn) f32,
      w1:  (F*V, H) mm_dtype   (embedding folded into layer-1 weight)
      w1n: (Nn, H) f32, b1: (1, H) f32
      w2:  (H, O) mm_dtype, b2: (1, O) f32
      wc:  (1, O) f32 [scalar head] or (O, C) f32, bc: (1, C) f32
      out: (C, TM) f32  -- lane-dense (batch on lanes)
    """
    if use_onehot:
        if has_num:
            (cat_ref, num_ref, w1_ref, w1n_ref, b1_ref, w2_ref, b2_ref,
             wc_ref, bc_ref, out_ref) = refs
        else:
            (cat_ref, w1_ref, b1_ref, w2_ref, b2_ref, wc_ref, bc_ref,
             out_ref) = refs
            num_ref = None
            w1n_ref = None

        tm = cat_ref.shape[0]
        fv = num_fields * vocab_size
        cat = cat_ref[...]                                        # (TM, F) i32

        # One-hot over the flattened (field, vocab) axis in a single VPU pass:
        # F compares + (F-1) ORs + one cast.  Garbage rows of a partial edge
        # tile only produce garbage output columns, which Pallas masks on
        # writeback (no data-dependent addressing -> no OOB risk).
        col = jax.lax.broadcasted_iota(jnp.int32, (tm, fv), 1)    # (TM, F*V)
        hit = col == cat[:, 0:1]
        for f in range(1, num_fields):                            # static, tiny
            hit = jnp.logical_or(hit, col == cat[:, f:f + 1] + f * vocab_size)
        x = hit.astype(matmul_dtype)

        # Layer 1: one MXU pass for the (exact-in-bf16) one-hot operand.
        h1 = jnp.dot(x, w1_ref[...], preferred_element_type=jnp.float32)

        if has_num:
            num = num_ref[...]
            if num_on_vpu:
                # Numeric part as Nn rank-1 VPU updates instead of a second,
                # fully padded MXU contraction (K=Nn would pad to 128/256).
                for j in range(num.shape[1]):                     # static, tiny
                    h1 = h1 + num[:, j:j + 1] * w1n_ref[j:j + 1, :]
            else:
                h1 = h1 + jnp.dot(num, w1n_ref[...],
                                  preferred_element_type=jnp.float32)
        h1 = h1 + b1_ref[...]
    else:
        # Dense fallback: embeddings were gathered + concatenated in the wrapper.
        x_ref, w1_ref, b1_ref, w2_ref, b2_ref, wc_ref, bc_ref, out_ref = refs
        h1 = (jnp.dot(x_ref[...].astype(matmul_dtype), w1_ref[...],
                      preferred_element_type=jnp.float32) + b1_ref[...])

    h1 = jnp.maximum(h1, 0.0)

    h2 = (jnp.dot(h1.astype(matmul_dtype), w2_ref[...],
                  preferred_element_type=jnp.float32) + b2_ref[...])
    h2 = jnp.maximum(h2, 0.0)

    if clf_is_scalar:
        # (O -> 1): VPU multiply + cross-lane reduce; skips an MXU drain that
        # would use 1 of 128/256 output lanes.
        logits = jnp.sum(h2 * wc_ref[...], axis=-1, keepdims=True) + bc_ref[...]
    else:
        logits = jnp.dot(h2, wc_ref[...],
                         preferred_element_type=jnp.float32) + bc_ref[...]

    probs = jax.nn.sigmoid(logits)                                # (TM, C) f32
    # Lane-dense store: one XLU transpose per tile, then an unmasked vst into
    # the (C, TM) block (batch on the lane axis).
    out_ref[...] = jnp.transpose(probs).astype(out_ref.dtype)


# ------------------------------ wrapper --------------------------------------

def adda_forward_pallas(cat, num, params, *, tm_max=2048,
                        matmul_dtype=jnp.float32,
                        onehot_max_fv=4096,
                        onehot_max_w1cat_bytes=8 * 1024 * 1024):
    """ADDA.forward: sigmoid(clf(target_fex(cat, num))) as one fused kernel."""
    emb, w1, b1, w2, b2, wc, bc = params
    F, V, E = emb.shape
    B = int(cat.shape[0])
    H = int(w1.shape[1])
    O = int(w2.shape[1])
    C = int(wc.shape[1])

    has_num = num is not None
    if has_num:
        num = num.astype(jnp.float32)
        n_num = int(num.shape[1])
    else:
        n_num = 0

    w1e = w1[:F * E]
    w1n = w1[F * E:] if has_num else None

    mm_itemsize = jnp.dtype(matmul_dtype).itemsize
    use_onehot = (F * V <= onehot_max_fv
                  and F * V * H * mm_itemsize <= onehot_max_w1cat_bytes)

    clf_is_scalar = (C == 1)
    wc_in = wc.T if clf_is_scalar else wc          # (1, O) f32 for the VPU head
    num_on_vpu = has_num and (n_num <= 32)

    if use_onehot:
        # Fold the embedding table into the first-layer weight (tiny,
        # batch-free precompute):  W1cat[f*V + v, :] = emb[f, v, :] @ w1e_f
        w1cat = jnp.einsum('fve,feh->fvh', emb,
                           w1e.reshape(F, E, H)).reshape(F * V, H)
        k_main = F * V
        tensors = [cat.astype(jnp.int32)]
        if has_num:
            tensors.append(num)
        weights = [w1cat.astype(matmul_dtype)]     # wrapper-side cast (bf16 opt-in)
        if has_num:
            weights.append(w1n.astype(jnp.float32))
        weights += [b1.astype(jnp.float32), w2.astype(matmul_dtype),
                    b2.astype(jnp.float32), wc_in.astype(jnp.float32),
                    bc.astype(jnp.float32)]
    else:
        # Large-vocab fallback: gather in the wrapper, dense MLP in the kernel.
        x_emb = emb[jnp.arange(F)[None, :], cat].reshape(B, F * E)
        x = jnp.concatenate([x_emb, num], axis=-1) if has_num else x_emb
        k_main = int(x.shape[1])
        tensors = [x.astype(jnp.float32)]
        w1_dense = (w1 if has_num else w1e).astype(matmul_dtype)
        weights = [w1_dense, b1.astype(jnp.float32), w2.astype(matmul_dtype),
                   b2.astype(jnp.float32), wc_in.astype(jnp.float32),
                   bc.astype(jnp.float32)]

    # ---- padded VMEM accounting + TM selection ------------------------------
    def tile_vmem_bytes(tm):
        need = 0
        if use_onehot:
            need += 2 * _padded_tile_bytes(tm, F, 4)                # cat tile
            if has_num:
                need += 2 * _padded_tile_bytes(tm, n_num, 4)        # num tile
        else:
            need += 2 * _padded_tile_bytes(tm, k_main, 4)           # dense x tile
        need += 2 * _padded_tile_bytes(C, tm, 4)                    # lane-dense out
        for a in weights:                                           # resident, 2-buf
            need += 2 * _padded_tile_bytes(a.shape[0], a.shape[1],
                                           a.dtype.itemsize)
        # in-flight intermediates (one-hot/x, h1 (+cast), h2, transposed probs)
        interm = (_padded_tile_bytes(tm, k_main, mm_itemsize)
                  + _padded_tile_bytes(tm, H, 4)
                  + _padded_tile_bytes(tm, H, mm_itemsize)
                  + _padded_tile_bytes(tm, O, 4)
                  + _padded_tile_bytes(C, tm, 4))
        return need + 2 * interm

    budget = 48 * 1024 * 1024      # usable everywhere (v7x: 64 MiB physical)
    if B < 256:
        TM = B                     # full-dim blocks, single grid step
    else:
        tm_cap = max(128, (min(tm_max, B) // 128) * 128)
        # >= 2 grid steps (v7x has 2 TCs); multiple of 128 keeps the lane-dense
        # output block (8,128)-legal.
        TM = min(tm_cap, max(128, _round_up(pl.cdiv(B, 2), 128)))
        while TM > 128 and tile_vmem_bytes(TM) > budget:
            TM = max(128, (TM // 2 // 128) * 128)
    nb = pl.cdiv(B, TM)
    vmem_limit = int(min(budget,
                         max(4 * 1024 * 1024,
                             tile_vmem_bytes(TM) + (2 << 20))))

    cost = pl.CostEstimate(
        flops=2 * B * (k_main * H + H * O + O * C),
        transcendentals=B * C,
        bytes_accessed=int(4 * B * ((F + n_num) if use_onehot else k_main)
                           + 4 * B * C
                           + sum(int(a.size) * a.dtype.itemsize
                                 for a in weights)),
    )

    def batch_spec(ncols):
        return pl.BlockSpec((TM, ncols), lambda i: (i, 0))

    def resident_spec(a):
        nd = a.ndim
        return pl.BlockSpec(tuple(a.shape), lambda i: (0,) * nd)

    if use_onehot:
        in_specs = [batch_spec(F)]
        if has_num:
            in_specs.append(batch_spec(n_num))
    else:
        in_specs = [batch_spec(k_main)]
    in_specs += [resident_spec(a) for a in weights]

    kernel = functools.partial(
        _adda_kernel, num_fields=F, vocab_size=V, use_onehot=use_onehot,
        has_num=has_num, num_on_vpu=num_on_vpu, matmul_dtype=matmul_dtype,
        clf_is_scalar=clf_is_scalar)

    out_cb = pl.pallas_call(
        kernel,
        out_shape=jax.ShapeDtypeStruct((C, B), jnp.float32),
        grid_spec=pltpu.PrefetchScalarGridSpec(
            num_scalar_prefetch=0,
            grid=(nb,),
            in_specs=in_specs,
            out_specs=pl.BlockSpec((C, TM), lambda i: (0, i)),
        ),
        compiler_params=pltpu.CompilerParams(
            dimension_semantics=("parallel",),
            vmem_limit_bytes=vmem_limit),
        cost_estimate=cost,
    )(*tensors, *weights)

    return out_cb.T                               # (B, C), as the module returns


def adda_forward(cat, num, params):
    return adda_forward_pallas(cat, num, params)


# --------------------------- parameter construction --------------------------

def make_params(key, num_fields, vocab_size, embed_dim, num_numeric,
                hidden_size, output_size, clf_size):
    ks = jax.random.split(key, 6)
    d_in = num_fields * embed_dim + num_numeric
    emb = 0.1 * jax.random.normal(ks[0], (num_fields, vocab_size, embed_dim),
                                  dtype=jnp.float32)
    w1 = 0.1 * jax.random.normal(ks[1], (d_in, hidden_size), dtype=jnp.float32)
    b1 = jnp.zeros((1, hidden_size), dtype=jnp.float32)
    w2 = 0.1 * jax.random.normal(ks[2], (hidden_size, output_size),
                                 dtype=jnp.float32)
    b2 = jnp.zeros((1, output_size), dtype=jnp.float32)
    wc = 0.1 * jax.random.normal(ks[3], (output_size, clf_size),
                                 dtype=jnp.float32)
    bc = jnp.zeros((1, clf_size), dtype=jnp.float32)
    return emb, w1, b1, w2, b2, wc, bc


# ----------------------------------- main ------------------------------------

if __name__ == "__main__":
    num_fields, vocab_size, embed_dim = 4, 10, 8
    num_numeric, hidden_size, output_size, clf_size = 4, 32, 16, 1

    key = jax.random.PRNGKey(0)
    k_cat, k_num, k_par, k_cat2, k_num2 = jax.random.split(key, 5)

    params = make_params(k_par, num_fields, vocab_size, embed_dim, num_numeric,
                         hidden_size, output_size, clf_size)
    emb, w1, b1, w2, b2, wc, bc = params

    def reference(cat, num):
        b = cat.shape[0]
        x = emb[jnp.arange(num_fields)[None, :], cat].reshape(b, -1)
        if num is not None:
            x = jnp.concatenate([x, num], axis=-1)
            w = w1
        else:
            w = w1[:num_fields * embed_dim]
        h = jnp.maximum(x @ w + b1, 0.0)
        h = jnp.maximum(h @ w2 + b2, 0.0)
        return jax.nn.sigmoid(h @ wc + bc)

    # 1) small batch, f32 MXU operands
    cat = jax.random.randint(k_cat, (8, num_fields), 0, vocab_size,
                             dtype=jnp.int32)
    num = jax.random.normal(k_num, (8, num_numeric), dtype=jnp.float32)
    out = jax.block_until_ready(adda_forward(cat, num, params))
    ref = reference(cat, num)
    assert out.shape == (8, clf_size)
    assert jnp.allclose(out, ref, atol=1e-5, rtol=1e-5), \
        float(jnp.max(jnp.abs(out - ref)))

    # 2) ragged batch (B % TM != 0): exercises the >=2-step grid, lane-dense
    #    (C, TM) output tiling and the partial edge tile.
    cat2 = jax.random.randint(k_cat2, (300, num_fields), 0, vocab_size,
                              dtype=jnp.int32)
    num2 = jax.random.normal(k_num2, (300, num_numeric), dtype=jnp.float32)
    out2 = jax.block_until_ready(adda_forward(cat2, num2, params))
    ref2 = reference(cat2, num2)
    assert out2.shape == (300, clf_size)
    assert jnp.allclose(out2, ref2, atol=1e-5, rtol=1e-5), \
        float(jnp.max(jnp.abs(out2 - ref2)))

    # 3) num=None path (the module allows forward(cat) without numerics)
    out3 = jax.block_until_ready(adda_forward(cat, None, params))
    ref3 = reference(cat, None)
    assert jnp.allclose(out3, ref3, atol=1e-5, rtol=1e-5), \
        float(jnp.max(jnp.abs(out3 - ref3)))

    # 4) bf16 MXU operands (recommended on v6e/v7x); accumulation stays f32,
    #    so only a loose tolerance is needed.
    out4 = jax.block_until_ready(
        adda_forward_pallas(cat, num, params, matmul_dtype=jnp.bfloat16))
    assert jnp.allclose(out4, ref, atol=2e-2, rtol=2e-2), \
        float(jnp.max(jnp.abs(out4 - ref)))

    print("KERNEL_OK")
</pallas_src>

<mosaic_0001>
module attributes {stable_mosaic.version = 11 : i64} {
  func.func @_adda_kernel(%arg0: i32, %arg1: memref<8x4xi32, #tpu.memory_space<vmem>>, %arg2: memref<8x4xf32, #tpu.memory_space<vmem>>, %arg3: memref<40x32xf32, #tpu.memory_space<vmem>>, %arg4: memref<4x32xf32, #tpu.memory_space<vmem>>, %arg5: memref<1x32xf32, #tpu.memory_space<vmem>>, %arg6: memref<32x16xf32, #tpu.memory_space<vmem>>, %arg7: memref<1x16xf32, #tpu.memory_space<vmem>>, %arg8: memref<1x16xf32, #tpu.memory_space<vmem>>, %arg9: memref<1x1xf32, #tpu.memory_space<vmem>>, %arg10: memref<1x8xf32, #tpu.memory_space<vmem>>) attributes {dimension_semantics = [#tpu.dimension_semantics<parallel>], iteration_bounds = array<i64: 1>, scalar_prefetch = 0 : i64, scratch_operands = 0 : i64, tpu.core_type = #tpu.core_type<tc>, window_params = [{transform_indices = @transform_0, window_bounds = array<i64: 8, 4>}, {transform_indices = @transform_1, window_bounds = array<i64: 8, 4>}, {pipeline_mode = #tpu.pipeline_mode<synchronous>, transform_indices = @transform_2, window_bounds = array<i64: 40, 32>}, {pipeline_mode = #tpu.pipeline_mode<synchronous>, transform_indices = @transform_3, window_bounds = array<i64: 4, 32>}, {pipeline_mode = #tpu.pipeline_mode<synchronous>, transform_indices = @transform_4, window_bounds = array<i64: 1, 32>}, {pipeline_mode = #tpu.pipeline_mode<synchronous>, transform_indices = @transform_5, window_bounds = array<i64: 32, 16>}, {pipeline_mode = #tpu.pipeline_mode<synchronous>, transform_indices = @transform_6, window_bounds = array<i64: 1, 16>}, {pipeline_mode = #tpu.pipeline_mode<synchronous>, transform_indices = @transform_7, window_bounds = array<i64: 1, 16>}, {pipeline_mode = #tpu.pipeline_mode<synchronous>, transform_indices = @transform_8, window_bounds = array<i64: 1, 1>}, {transform_indices = @transform_9, window_bounds = array<i64: 1, 8>}]} {
    %c0 = arith.constant 0 : index
    %c0_0 = arith.constant 0 : index
    %0 = vector.load %arg1[%c0, %c0_0] : memref<8x4xi32, #tpu.memory_space<vmem>>, vector<8x4xi32>
    %1 = tpu.iota {dimensions = array<i32: 1>} : vector<8x40xi32>
    %2 = vector.extract_strided_slice %0 {offsets = [0, 0], sizes = [8, 1], strides = [1, 1]} : vector<8x4xi32> to vector<8x1xi32>
    %3 = vector.broadcast %2 : vector<8x1xi32> to vector<8x40xi32>
    %4 = arith.cmpi eq, %1, %3 : vector<8x40xi32>
    %5 = vector.extract_strided_slice %0 {offsets = [0, 1], sizes = [8, 1], strides = [1, 1]} : vector<8x4xi32> to vector<8x1xi32>
    %c10_i32 = arith.constant 10 : i32
    %6 = vector.broadcast %c10_i32 : i32 to vector<8x1xi32>
    %7 = arith.addi %5, %6 : vector<8x1xi32>
    %8 = vector.broadcast %7 : vector<8x1xi32> to vector<8x40xi32>
    %9 = arith.cmpi eq, %1, %8 : vector<8x40xi32>
    %10 = arith.ori %4, %9 : vector<8x40xi1>
    %11 = vector.extract_strided_slice %0 {offsets = [0, 2], sizes = [8, 1], strides = [1, 1]} : vector<8x4xi32> to vector<8x1xi32>
    %c20_i32 = arith.constant 20 : i32
    %12 = vector.broadcast %c20_i32 : i32 to vector<8x1xi32>
    %13 = arith.addi %11, %12 : vector<8x1xi32>
    %14 = vector.broadcast %13 : vector<8x1xi32> to vector<8x40xi32>
    %15 = arith.cmpi eq, %1, %14 : vector<8x40xi32>
    %16 = arith.ori %10, %15 : vector<8x40xi1>
    %17 = vector.extract_strided_slice %0 {offsets = [0, 3], sizes = [8, 1], strides = [1, 1]} : vector<8x4xi32> to vector<8x1xi32>
    %c30_i32 = arith.constant 30 : i32
    %18 = vector.broadcast %c30_i32 : i32 to vector<8x1xi32>
    %19 = arith.addi %17, %18 : vector<8x1xi32>
    %20 = vector.broadcast %19 : vector<8x1xi32> to vector<8x40xi32>
    %21 = arith.cmpi eq, %1, %20 : vector<8x40xi32>
    %22 = arith.ori %16, %21 : vector<8x40xi1>
    %23 = arith.extui %22 : vector<8x40xi1> to vector<8x40xi32>
    %24 = arith.sitofp %23 : vector<8x40xi32> to vector<8x40xf32>
    %c0_1 = arith.constant 0 : index
    %c0_2 = arith.constant 0 : index
    %25 = vector.load %arg3[%c0_1, %c0_2] : memref<40x32xf32, #tpu.memory_space<vmem>>, vector<40x32xf32>
    %cst = arith.constant dense<0.000000e+00> : vector<8x32xf32>
    %26 = tpu.matmul %24, %25, %cst {dimension_numbers = #tpu.dot_dimension_numbers<[1], [0], [0], [1], [0, 0, 1, 1], [], []>} : vector<8x40xf32>, vector<40x32xf32>, vector<8x32xf32> -> vector<8x32xf32>
    %c0_3 = arith.constant 0 : index
    %c0_4 = arith.constant 0 : index
    %27 = vector.load %arg2[%c0_3, %c0_4] : memref<8x4xf32, #tpu.memory_space<vmem>>, vector<8x4xf32>
    %28 = vector.extract_strided_slice %27 {offsets = [0, 0], sizes = [8, 1], strides = [1, 1]} : vector<8x4xf32> to vector<8x1xf32>
    %c0_5 = arith.constant 0 : index
    %c0_6 = arith.constant 0 : index
    %29 = vector.load %arg4[%c0_5, %c0_6] : memref<4x32xf32, #tpu.memory_space<vmem>>, vector<1x32xf32>
    %30 = vector.broadcast %28 : vector<8x1xf32> to vector<8x32xf32>
    %31 = vector.broadcast %29 : vector<1x32xf32> to vector<8x32xf32>
    %32 = arith.mulf %30, %31 : vector<8x32xf32>
    %33 = arith.addf %26, %32 : vector<8x32xf32>
    %34 = vector.extract_strided_slice %27 {offsets = [0, 1], sizes = [8, 1], strides = [1, 1]} : vector<8x4xf32> to vector<8x1xf32>
    %c1 = arith.constant 1 : index
    %c0_7 = arith.constant 0 : index
    %35 = vector.load %arg4[%c1, %c0_7] : memref<4x32xf32, #tpu.memory_space<vmem>>, vector<1x32xf32>
    %36 = vector.broadcast %34 : vector<8x1xf32> to vector<8x32xf32>
    %37 = vector.broadcast %35 : vector<1x32xf32> to vector<8x32xf32>
    %38 = arith.mulf %36, %37 : vector<8x32xf32>
    %39 = arith.addf %33, %38 : vector<8x32xf32>
    %40 = vector.extract_strided_slice %27 {offsets = [0, 2], sizes = [8, 1], strides = [1, 1]} : vector<8x4xf32> to vector<8x1xf32>
    %c2 = arith.constant 2 : index
    %c0_8 = arith.constant 0 : index
    %41 = vector.load %arg4[%c2, %c0_8] : memref<4x32xf32, #tpu.memory_space<vmem>>, vector<1x32xf32>
    %42 = vector.broadcast %40 : vector<8x1xf32> to vector<8x32xf32>
    %43 = vector.broadcast %41 : vector<1x32xf32> to vector<8x32xf32>
    %44 = arith.mulf %42, %43 : vector<8x32xf32>
    %45 = arith.addf %39, %44 : vector<8x32xf32>
    %46 = vector.extract_strided_slice %27 {offsets = [0, 3], sizes = [8, 1], strides = [1, 1]} : vector<8x4xf32> to vector<8x1xf32>
    %c3 = arith.constant 3 : index
    %c0_9 = arith.constant 0 : index
    %47 = vector.load %arg4[%c3, %c0_9] : memref<4x32xf32, #tpu.memory_space<vmem>>, vector<1x32xf32>
    %48 = vector.broadcast %46 : vector<8x1xf32> to vector<8x32xf32>
    %49 = vector.broadcast %47 : vector<1x32xf32> to vector<8x32xf32>
    %50 = arith.mulf %48, %49 : vector<8x32xf32>
    %51 = arith.addf %45, %50 : vector<8x32xf32>
    %c0_10 = arith.constant 0 : index
    %c0_11 = arith.constant 0 : index
    %52 = vector.load %arg5[%c0_10, %c0_11] : memref<1x32xf32, #tpu.memory_space<vmem>>, vector<1x32xf32>
    %53 = vector.broadcast %52 : vector<1x32xf32> to vector<8x32xf32>
    %54 = arith.addf %51, %53 : vector<8x32xf32>
    %cst_12 = arith.constant 0.000000e+00 : f32
    %55 = vector.broadcast %cst_12 : f32 to vector<8x32xf32>
    %56 = arith.maximumf %54, %55 : vector<8x32xf32>
    %c0_13 = arith.constant 0 : index
    %c0_14 = arith.constant 0 : index
    %57 = vector.load %arg6[%c0_13, %c0_14] : memref<32x16xf32, #tpu.memory_space<vmem>>, vector<32x16xf32>
    %cst_15 = arith.constant dense<0.000000e+00> : vector<8x16xf32>
    %58 = tpu.matmul %56, %57, %cst_15 {dimension_numbers = #tpu.dot_dimension_numbers<[1], [0], [0], [1], [0, 0, 1, 1], [], []>} : vector<8x32xf32>, vector<32x16xf32>, vector<8x16xf32> -> vector<8x16xf32>
    %c0_16 = arith.constant 0 : index
    %c0_17 = arith.constant 0 : index
    %59 = vector.load %arg7[%c0_16, %c0_17] : memref<1x16xf32, #tpu.memory_space<vmem>>, vector<1x16xf32>
    %60 = vector.broadcast %59 : vector<1x16xf32> to vector<8x16xf32>
    %61 = arith.addf %58, %60 : vector<8x16xf32>
    %cst_18 = arith.constant 0.000000e+00 : f32
    %62 = vector.broadcast %cst_18 : f32 to vector<8x16xf32>
    %63 = arith.maximumf %61, %62 : vector<8x16xf32>
    %c0_19 = arith.constant 0 : index
    %c0_20 = arith.constant 0 : index
    %64 = vector.load %arg8[%c0_19, %c0_20] : memref<1x16xf32, #tpu.memory_space<vmem>>, vector<1x16xf32>
    %65 = vector.broadcast %64 : vector<1x16xf32> to vector<8x16xf32>
    %66 = arith.mulf %63, %65 : vector<8x16xf32>
    %cst_21 = arith.constant dense<0.000000e+00> : vector<8xf32>
    %67 = vector.multi_reduction <add>, %66, %cst_21 [1] : vector<8x16xf32> to vector<8xf32>
    %68 = vector.shape_cast %67 : vector<8xf32> to vector<8x1xf32>
    %c0_22 = arith.constant 0 : index
    %c0_23 = arith.constant 0 : index
    %69 = vector.load %arg9[%c0_22, %c0_23] : memref<1x1xf32, #tpu.memory_space<vmem>>, vector<1x1xf32>
    %70 = vector.broadcast %69 : vector<1x1xf32> to vector<8x1xf32>
    %71 = arith.addf %68, %70 : vector<8x1xf32>
    %72 = arith.negf %71 : vector<8x1xf32>
    %73 = math.exp %72 : vector<8x1xf32>
    %cst_24 = arith.constant 1.000000e+00 : f32
    %74 = vector.broadcast %cst_24 : f32 to vector<8x1xf32>
    %75 = arith.addf %74, %73 : vector<8x1xf32>
    %76 = arith.divf %74, %75 : vector<8x1xf32>
    %77 = tpu.transpose %76, [1, 0] : vector<8x1xf32> -> vector<1x8xf32>
    %c0_25 = arith.constant 0 : index
    %c0_26 = arith.constant 0 : index
    %78 = vector.load %arg10[%c0_25, %c0_26] : memref<1x8xf32, #tpu.memory_space<vmem>>, vector<1x8xf32>
    tpu.vector_store %arg10[%c0_25, %c0_26], %77 {strides = array<i32>} : memref<1x8xf32, #tpu.memory_space<vmem>>, vector<1x8xf32>,
    return
  }
  func.func @transform_0(%arg0: i32) -> (i32, i32) {
    %c0_i32 = arith.constant 0 : i32
    %c0_i32_0 = arith.constant 0 : i32
    return %arg0, %c0_i32 : i32, i32
  }
  func.func @transform_1(%arg0: i32) -> (i32, i32) {
    %c0_i32 = arith.constant 0 : i32
    %c0_i32_0 = arith.constant 0 : i32
    return %arg0, %c0_i32 : i32, i32
  }
  func.func @transform_2(%arg0: i32) -> (i32, i32) {
    %c0_i32 = arith.constant 0 : i32
    %c0_i32_0 = arith.constant 0 : i32
    %c0_i32_1 = arith.constant 0 : i32
    return %c0_i32, %c0_i32_0 : i32, i32
  }
  func.func @transform_3(%arg0: i32) -> (i32, i32) {
    %c0_i32 = arith.constant 0 : i32
    %c0_i32_0 = arith.constant 0 : i32
    %c0_i32_1 = arith.constant 0 : i32
    return %c0_i32, %c0_i32_0 : i32, i32
  }
  func.func @transform_4(%arg0: i32) -> (i32, i32) {
    %c0_i32 = arith.constant 0 : i32
    %c0_i32_0 = arith.constant 0 : i32
    %c0_i32_1 = arith.constant 0 : i32
    return %c0_i32, %c0_i32_0 : i32, i32
  }
  func.func @transform_5(%arg0: i32) -> (i32, i32) {
    %c0_i32 = arith.constant 0 : i32
    %c0_i32_0 = arith.constant 0 : i32
    %c0_i32_1 = arith.constant 0 : i32
    return %c0_i32, %c0_i32_0 : i32, i32
  }
  func.func @transform_6(%arg0: i32) -> (i32, i32) {
    %c0_i32 = arith.constant 0 : i32
    %c0_i32_0 = arith.constant 0 : i32
    %c0_i32_1 = arith.constant 0 : i32
    return %c0_i32, %c0_i32_0 : i32, i32
  }
  func.func @transform_7(%arg0: i32) -> (i32, i32) {
    %c0_i32 = arith.constant 0 : i32
    %c0_i32_0 = arith.constant 0 : i32
    %c0_i32_1 = arith.constant 0 : i32
    return %c0_i32, %c0_i32_0 : i32, i32
  }
  func.func @transform_8(%arg0: i32) -> (i32, i32) {
    %c0_i32 = arith.constant 0 : i32
    %c0_i32_0 = arith.constant 0 : i32
    %c0_i32_1 = arith.constant 0 : i32
    return %c0_i32, %c0_i32_0 : i32, i32
  }
  func.func @transform_9(%arg0: i32) -> (i32, i32) {
    %c0_i32 = arith.constant 0 : i32
    %c0_i32_0 = arith.constant 0 : i32
    return %c0_i32, %arg0 : i32, i32
  }
}

</mosaic_0001>

<llo_original>
// kernel: tpu_custom_call.1
$region0: #{tpu_custom_call.1}
  #allocation0 [shape = 'u32[]', space=smem, size = 0x4, offset = 0x4, fixed_abs, tag = 'smem constant byte address 0x4 - core index']
  #allocation1 [shape = 'u32[144,128]{1,0:T(1,128)}', space=vmem, size = 0x12000, scoped, tag = 'internal scratch']
  #allocation2 [shape = 'f32[1,1]{1,0:T(1,128)S(1)}', space=vmem, size = 0x200, scoped, tag = 'scoped memory for tpu_custom_call.1']
  %s0 = inlined_call_operand.vmem [shape: s32[8,4], index: 0, kind: input, shape index: {}]
  %s1 = inlined_call_operand.vmem [shape: f32[8,4], index: 1, kind: input, shape index: {}]
  %s2 = inlined_call_operand.vmem [shape: f32[40,32], index: 2, kind: input, shape index: {}]
  %s3 = inlined_call_operand.vmem [shape: f32[4,32], index: 3, kind: input, shape index: {}]
  %s4 = inlined_call_operand.vmem [shape: f32[1,32], index: 4, kind: input, shape index: {}]
  %s5 = inlined_call_operand.vmem [shape: f32[32,16], index: 5, kind: input, shape index: {}]
  %s6 = inlined_call_operand.vmem [shape: f32[1,16], index: 6, kind: input, shape index: {}]
  %s7 = inlined_call_operand.vmem [shape: f32[1,16], index: 7, kind: input, shape index: {}]
  %s8 = inlined_call_operand.<no memory space> [shape: f32[1,1], index: 8, kind: input, shape index: {}]
  %s9 = inlined_call_operand.hbm [shape: f32[1,8], index: 9, kind: output, shape index: {}]
  %s10 = sld [smem:[#allocation0]]
  $region46: #{tpu_custom_call.1} parent=0
    _
  %s12 = ssub.s32 1, %s10
  %s13 = scalar_select 0, %s12, %s10
  %v14 = vstv %s8
  %15 = vst [vmem:[#allocation2] sm:$0x1] %v14
  $region1: #{tpu_custom_call.1} parent=0
    #allocation3 [shape = 'u8[512]{0}', space=vmem, size = 0x400, scoped, tag = 'output window, operand 0, single buffered']
    #allocation4 [shape = 's32[1]{0}', space=sflag, size = 0x4, scoped, tag = 'scoped memory for tpu_custom_call.1']
    %16 = vsyncpa [#allocation4], 0
    // Predicated region
    $region2: #{tpu_custom_call.1} parent=1 // pred_check
      _
    $region3: #{tpu_custom_call.1} parent=1 // pred_check_branch
      %18 = sbr.rel (0) target = $region5
    $region4: #{tpu_custom_call.1} parent=1 // pred_region
      _
    $region5: #{tpu_custom_call.1} parent=1 // pred_fallthru
      _
    // Predicated region
    $region6: #{tpu_custom_call.1} parent=1 // pred_check
      _
    $region7: #{tpu_custom_call.1} parent=1 // pred_check_branch
      %20 = sbr.rel (0) target = $region9
    $region8: #{tpu_custom_call.1} parent=1 // pred_region
      _
    $region9: #{tpu_custom_call.1} parent=1 // pred_fallthru
      _
    // Predicated region
    $region10: #{tpu_custom_call.1} parent=1 // pred_check
      _
    $region11: #{tpu_custom_call.1} parent=1 // pred_check_branch
      %22 = sbr.rel (0) target = $region13
    $region12: #{tpu_custom_call.1} parent=1 // pred_region
      _
    $region13: #{tpu_custom_call.1} parent=1 // pred_fallthru
      _
    // Predicated region
    $region14: #{tpu_custom_call.1} parent=1 // pred_check
      _
    $region15: #{tpu_custom_call.1} parent=1 // pred_check_branch
      %24 = sbr.rel (0) target = $region17
    $region16: #{tpu_custom_call.1} parent=1 // pred_region
      _
    $region17: #{tpu_custom_call.1} parent=1 // pred_fallthru
      _
    // Predicated region
    $region18: #{tpu_custom_call.1} parent=1 // pred_check
      _
    $region19: #{tpu_custom_call.1} parent=1 // pred_check_branch
      %26 = sbr.rel (0) target = $region21
    $region20: #{tpu_custom_call.1} parent=1 // pred_region
      _
    $region21: #{tpu_custom_call.1} parent=1 // pred_fallthru
      _
    // Predicated region
    $region22: #{tpu_custom_call.1} parent=1 // pred_check
      _
    $region23: #{tpu_custom_call.1} parent=1 // pred_check_branch
      %28 = sbr.rel (0) target = $region25
    $region24: #{tpu_custom_call.1} parent=1 // pred_region
      _
    $region25: #{tpu_custom_call.1} parent=1 // pred_fallthru
      _
    // Predicated region
    $region26: #{tpu_custom_call.1} parent=1 // pred_check
      _
    $region27: #{tpu_custom_call.1} parent=1 // pred_check_branch
      %30 = sbr.rel (0) target = $region29
    $region28: #{tpu_custom_call.1} parent=1 // pred_region
      _
    $region29: #{tpu_custom_call.1} parent=1 // pred_fallthru
      _
    // Predicated region
    $region30: #{tpu_custom_call.1} parent=1 // pred_check
      _
    $region31: #{tpu_custom_call.1} parent=1 // pred_check_branch
      %32 = sbr.rel (0) target = $region33
    $region32: #{tpu_custom_call.1} parent=1 // pred_region
      _
    $region33: #{tpu_custom_call.1} parent=1 // pred_fallthru
      _
    // Predicated region
    $region34: #{tpu_custom_call.1} parent=1 // pred_check
      _
    $region35: #{tpu_custom_call.1} parent=1 // pred_check_branch
      %34 = sbr.rel (0) target = $region37
    $region36: #{tpu_custom_call.1} parent=1 // pred_region
      _
    $region37: #{tpu_custom_call.1} parent=1 // pred_fallthru
      _
    %v35 = vld [vmem:[%s0] sm:$0xff]
    %v36 = vlaneseq
    %v37 = vand.u32 %v36, 127
    %38 = vset.pattern.permute.xlu0 0
    %39 = vperm.xlu0 %38, %v35
    %v40 = vpop.permute.xlu0 %39
    %vm41 = vcmp.eq.s32.totalorder %v37, %v40
    %v42 = vadd.s32 %v35, 10
    %43 = vset.pattern.permute.xlu0 1
    %44 = vperm.xlu0 %43, %v42
    %v45 = vpop.permute.xlu0 %44
    %vm46 = vcmp.eq.s32.totalorder %v37, %v45
    %vm47 = vmor %vm41, %vm46
    %v48 = vadd.s32 %v35, 20
    %49 = vset.pattern.permute.xlu0 2
    %50 = vperm.xlu0 %49, %v48
    %v51 = vpop.permute.xlu0 %50
    %vm52 = vcmp.eq.s32.totalorder %v37, %v51
    %vm53 = vmor %vm47, %vm52
    %v54 = vadd.s32 %v35, 30
    %55 = vset.pattern.permute.xlu0 3
    %56 = vperm.xlu0 %55, %v54
    %v57 = vpop.permute.xlu0 %56
    %vm58 = vcmp.eq.s32.totalorder %v37, %v57
    %vm59 = vmor %vm53, %vm58
    %v60 = vsel %vm59, 1, 0
    %v61 = vcvt.s32.f32 %v60
    %v62 = vld [vmem:[%s2] sm:$0xff]
    %v63 = vld [vmem:[%s2 + $0x8] sm:$0xff]
    %v64 = vld [vmem:[%s2 + $0x10] sm:$0xff]
    %v65 = vld [vmem:[%s2 + $0x18] sm:$0xff]
    %v66 = vld [vmem:[%s2 + $0x20] sm:$0xff]
    %v67 = vld [vmem:[%s1] sm:$0xff]
    %v68 = vld [vmem:[%s3] sm:$0x1]
    %70 = vset.pattern.permute.xlu0 0
    %71 = vperm.xlu0 %70, %v67
    %v72 = vpop.permute.xlu0 %71
    %v74 = vlaneseq
    %v75 = vshrl.u32 %v74, 7
    %v76 = vsub.s32 0, %v75
    %v77 = vrot.slane %v68, %v76
    %v78 = vmul.f32 %v72, %v77
    %vm79 = vcmask 326656
    %v81 = vsel %vm79, %v61, 0
    %83 = vmatprep.subr.mxu0 0.0
    %84 = vmatpush1.msra.mxu0 0.0
    %85 = vmatprep.subr.mxu0 0.0
    %86 = vmatpush1.msra.mxu0 0.0
    %87 = vmatprep.subr.mxu0 0.0
    %88 = vmatpush1.msra.mxu0 0.0
    %89 = vmatprep.subr.mxu0 0.0
    %90 = vmatpush1.msra.mxu0 0.0
    %91 = vmatprep.subr.mxu0 0.0
    %92 = vmatpush1.msra.mxu0 0.0
    %93 = vmatprep.subr.mxu0 0.0
    %94 = vmatpush1.msra.mxu0 0.0
    %95 = vmatprep.subr.mxu0 0.0
    %96 = vmatpush1.msra.mxu0 0.0
    %97 = vmatprep.subr.mxu0 0.0
    %98 = vmatpush1.msra.mxu0 0.0
    %99 = vmatprep.subr.mxu0 0.0
    %100 = vmatpush1.msra.mxu0 0.0
    %101 = vmatprep.subr.mxu0 0.0
    %102 = vmatpush1.msra.mxu0 0.0
    %103 = vmatprep.subr.mxu0 0.0
    %104 = vmatpush1.msra.mxu0 0.0
    %105 = vmatprep.subr.mxu0 0.0
    %106 = vmatpush1.msra.mxu0 %v66
    %107 = vmatprep.subr.mxu0 0.0
    %108 = vmatpush1.msra.mxu0 %v65
    %109 = vmatprep.subr.mxu0 0.0
    %110 = vmatpush1.msra.mxu0 %v64
    %111 = vmatprep.subr.mxu0 0.0
    %112 = vmatpush1.msra.mxu0 %v63
    %113 = vmatprep.subr.mxu0 0.0
    %114 = vmatpush1.msra.mxu0 %v62
    %115 = vmatprep.subr.mxu0 0.0
    %116 = vmatpush2.msra.mxu0 0.0
    %117 = vmatprep.subr.mxu0 0.0
    %118 = vmatpush2.msra.mxu0 0.0
    %119 = vmatprep.subr.mxu0 0.0
    %120 = vmatpush2.msra.mxu0 0.0
    %121 = vmatprep.subr.mxu0 0.0
    %122 = vmatpush2.msra.mxu0 0.0
    %123 = vmatprep.subr.mxu0 0.0
    %124 = vmatpush2.msra.mxu0 0.0
    %125 = vmatprep.subr.mxu0 0.0
    %126 = vmatpush2.msra.mxu0 0.0
    %127 = vmatprep.subr.mxu0 0.0
    %128 = vmatpush2.msra.mxu0 0.0
    %129 = vmatprep.subr.mxu0 0.0
    %130 = vmatpush2.msra.mxu0 0.0
    %131 = vmatprep.subr.mxu0 0.0
    %132 = vmatpush2.msra.mxu0 0.0
    %133 = vmatprep.subr.mxu0 0.0
    %134 = vmatpush2.msra.mxu0 0.0
    %135 = vmatprep.subr.mxu0 0.0
    %136 = vmatpush2.msra.mxu0 0.0
    %137 = vmatprep.subr.mxu0 0.0
    %138 = vmatpush2.msra.mxu0 0.0
    %139 = vmatprep.subr.mxu0 0.0
    %140 = vmatpush2.msra.mxu0 0.0
    %141 = vmatprep.subr.mxu0 0.0
    %142 = vmatpush2.msra.mxu0 0.0
    %143 = vmatprep.subr.mxu0 0.0
    %144 = vmatpush2.msra.mxu0 0.0
    %145 = vmatprep.subr.mxu0 0.0
    %146 = vmatpush2.msra.mxu0 0.0
    %147 = vmatprep.mubr.f32.mxu0 0.0
    %148 = vmatmul.mubr.f32.gmra.mxu0 %v81
    %v149 = vpop.f32.mrf.mxu0
    %v150 = vadd.f32 %v78, %v149
    %v151 = vpop.f32.mrf.mxu0
    %152 = vdwg.mxu0
    %v153 = vld [vmem:[%s3 + $0x1] sm:$0x1]
    %154 = vset.pattern.permute.xlu0 1
    %155 = vperm.xlu0 %154, %v67
    %v156 = vpop.permute.xlu0 %155
    %v158 = vlaneseq
    %v159 = vshrl.u32 %v158, 7
    %v160 = vsub.s32 0, %v159
    %v161 = vrot.slane %v153, %v160
    %v162 = vmul.f32 %v156, %v161
    %v163 = vadd.f32 %v150, %v162
    %v164 = vld [vmem:[%s3 + $0x2] sm:$0x1]
    %165 = vset.pattern.permute.xlu0 2
    %166 = vperm.xlu0 %165, %v67
    %v167 = vpop.permute.xlu0 %166
    %v169 = vlaneseq
    %v170 = vshrl.u32 %v169, 7
    %v171 = vsub.s32 0, %v170
    %v172 = vrot.slane %v164, %v171
    %v173 = vmul.f32 %v167, %v172
    %v174 = vadd.f32 %v163, %v173
    %v175 = vld [vmem:[%s3 + $0x3] sm:$0x1]
    %176 = vset.pattern.permute.xlu0 3
    %177 = vperm.xlu0 %176, %v67
    %v178 = vpop.permute.xlu0 %177
    %v180 = vlaneseq
    %v181 = vshrl.u32 %v180, 7
    %v182 = vsub.s32 0, %v181
    %v183 = vrot.slane %v175, %v182
    %v184 = vmul.f32 %v178, %v183
    %v185 = vadd.f32 %v174, %v184
    %v186 = vld [vmem:[%s4] sm:$0x1]
    %v188 = vlaneseq
    %v189 = vshrl.u32 %v188, 7
    %v190 = vsub.s32 0, %v189
    %v191 = vrot.slane %v186, %v190
    %v193 = vadd.f32 %v185, %v191
    %v194 = vmax.f32 %v193, 0.0
    %v195 = vld [vmem:[%s5] sm:$0xff]
    %v196 = vld [vmem:[%s5 + $0x8] sm:$0xff]
    %v197 = vld [vmem:[%s5 + $0x10] sm:$0xff]
    %v198 = vld [vmem:[%s5 + $0x18] sm:$0xff]
    %v199 = vld [vmem:[%s6] sm:$0x1]
    %v201 = vlaneseq
    %v202 = vshrl.u32 %v201, 7
    %v203 = vsub.s32 0, %v202
    %v204 = vrot.slane %v199, %v203
    %vm206 = vcmask 261120
    %v208 = vsel %vm206, %v194, 0
    %210 = vmatprep.subr.mxu0 0.0
    %211 = vmatpush1.msra.mxu0 0.0
    %212 = vmatprep.subr.mxu0 0.0
    %213 = vmatpush1.msra.mxu0 0.0
    %214 = vmatprep.subr.mxu0 0.0
    %215 = vmatpush1.msra.mxu0 0.0
    %216 = vmatprep.subr.mxu0 0.0
    %217 = vmatpush1.msra.mxu0 0.0
    %218 = vmatprep.subr.mxu0 0.0
    %219 = vmatpush1.msra.mxu0 0.0
    %220 = vmatprep.subr.mxu0 0.0
    %221 = vmatpush1.msra.mxu0 0.0
    %222 = vmatprep.subr.mxu0 0.0
    %223 = vmatpush1.msra.mxu0 0.0
    %224 = vmatprep.subr.mxu0 0.0
    %225 = vmatpush1.msra.mxu0 0.0
    %226 = vmatprep.subr.mxu0 0.0
    %227 = vmatpush1.msra.mxu0 0.0
    %228 = vmatprep.subr.mxu0 0.0
    %229 = vmatpush1.msra.mxu0 0.0
    %230 = vmatprep.subr.mxu0 0.0
    %231 = vmatpush1.msra.mxu0 0.0
    %232 = vmatprep.subr.mxu0 0.0
    %233 = vmatpush1.msra.mxu0 0.0
    %234 = vmatprep.subr.mxu0 0.0
    %235 = vmatpush1.msra.mxu0 %v198
    %236 = vmatprep.subr.mxu0 0.0
    %237 = vmatpush1.msra.mxu0 %v197
    %238 = vmatprep.subr.mxu0 0.0
    %239 = vmatpush1.msra.mxu0 %v196
    %240 = vmatprep.subr.mxu0 0.0
    %241 = vmatpush1.msra.mxu0 %v195
    %242 = vmatprep.subr.mxu0 0.0
    %243 = vmatpush2.msra.mxu0 0.0
    %244 = vmatprep.subr.mxu0 0.0
    %245 = vmatpush2.msra.mxu0 0.0
    %246 = vmatprep.subr.mxu0 0.0
    %247 = vmatpush2.msra.mxu0 0.0
    %248 = vmatprep.subr.mxu0 0.0
    %249 = vmatpush2.msra.mxu0 0.0
    %250 = vmatprep.subr.mxu0 0.0
    %251 = vmatpush2.msra.mxu0 0.0
    %252 = vmatprep.subr.mxu0 0.0
    %253 = vmatpush2.msra.mxu0 0.0
    %254 = vmatprep.subr.mxu0 0.0
    %255 = vmatpush2.msra.mxu0 0.0
    %256 = vmatprep.subr.mxu0 0.0
    %257 = vmatpush2.msra.mxu0 0.0
    %258 = vmatprep.subr.mxu0 0.0
    %259 = vmatpush2.msra.mxu0 0.0
    %260 = vmatprep.subr.mxu0 0.0
    %261 = vmatpush2.msra.mxu0 0.0
    %262 = vmatprep.subr.mxu0 0.0
    %263 = vmatpush2.msra.mxu0 0.0
    %264 = vmatprep.subr.mxu0 0.0
    %265 = vmatpush2.msra.mxu0 0.0
    %266 = vmatprep.subr.mxu0 0.0
    %267 = vmatpush2.msra.mxu0 0.0
    %268 = vmatprep.subr.mxu0 0.0
    %269 = vmatpush2.msra.mxu0 0.0
    %270 = vmatprep.subr.mxu0 0.0
    %271 = vmatpush2.msra.mxu0 0.0
    %272 = vmatprep.subr.mxu0 0.0
    %273 = vmatpush2.msra.mxu0 0.0
    %274 = vmatprep.mubr.f32.mxu0 0.0
    %275 = vmatmul.mubr.f32.gmra.mxu0 %v208
    %v276 = vpop.f32.mrf.mxu0
    %v277 = vadd.f32 %v204, %v276
    %v278 = vpop.f32.mrf.mxu0
    %279 = vdwg.mxu0
    %v280 = vmax.f32 %v277, 0.0
    %v281 = vld [vmem:[%s7] sm:$0x1]
    %v283 = vlaneseq
    %v284 = vshrl.u32 %v283, 7
    %v285 = vsub.s32 0, %v284
    %v286 = vrot.slane %v281, %v285
    %v288 = vmul.f32 %v280, %v286
    %vm289 = vcmask 130048
    %v290 = vsel %vm289, %v288, 0.0
    %291 = vadd.xlane.f32.xlu0 %v290
    %v292 = vpop.xlane.xlu0 %291
    %v293 = vld [vmem:[#allocation2] sm:$0x1]
    %v295 = vlaneseq
    %v296 = vshrl.u32 %v295, 7
    %v297 = vsub.s32 0, %v296
    %v298 = vrot.slane %v293, %v297
    %v300 = vadd.f32 %v292, %v298
    %v301 = vxor.u32 %v300, 2147483648
    %v302 = vmul.f32 %v301, 1.442695
    %v303 = vpow.pop %v302
    %v304 = vadd.f32 %v303, 1.0
    %v305 = vrcp.pop %v304
    %v306 = vmul.f32 1.0, %v305
    %307 = vxpose.xlu0.b32.start [1/16] %v306, 128
    %308 = vxpose.xlu0.b32.cont [2/16] 0.0, 128
    %309 = vxpose.xlu0.b32.cont [3/16] 0.0, 128
    %310 = vxpose.xlu0.b32.cont [4/16] 0.0, 128
    %311 = vxpose.xlu0.b32.cont [5/16] 0.0, 128
    %312 = vxpose.xlu0.b32.cont [6/16] 0.0, 128
    %313 = vxpose.xlu0.b32.cont [7/16] 0.0, 128
    %314 = vxpose.xlu0.b32.cont [8/16] 0.0, 128
    %315 = vxpose.xlu0.b32.cont [9/16] 0.0, 128
    %316 = vxpose.xlu0.b32.cont [10/16] 0.0, 128
    %317 = vxpose.xlu0.b32.cont [11/16] 0.0, 128
    %318 = vxpose.xlu0.b32.cont [12/16] 0.0, 128
    %319 = vxpose.xlu0.b32.cont [13/16] 0.0, 128
    %320 = vxpose.xlu0.b32.cont [14/16] 0.0, 128
    %321 = vxpose.xlu0.b32.cont [15/16] 0.0, 128
    %322 = vxpose.xlu0.b32.end [16/16] 0.0, 128
    %v323 = vpop.trf.xlu0
    %v324 = vpop.trf.xlu0
    %v325 = vpop.trf.xlu0
    %v326 = vpop.trf.xlu0
    %v327 = vpop.trf.xlu0
    %v328 = vpop.trf.xlu0
    %v329 = vpop.trf.xlu0
    %v330 = vpop.trf.xlu0
    %v331 = vpop.trf.xlu0
    %v332 = vpop.trf.xlu0
    %v333 = vpop.trf.xlu0
    %v334 = vpop.trf.xlu0
    %v335 = vpop.trf.xlu0
    %v336 = vpop.trf.xlu0
    %v337 = vpop.trf.xlu0
    %v338 = vpop.trf.xlu0
    %vm339 = vcmask 57344
    %340 = vst.msk [vmem:[#allocation3] sm:$0x1] %vm339, %v323
    // Predicated region
    $region38: #{tpu_custom_call.1} parent=1 // pred_check
      _
    $region39: #{tpu_custom_call.1} parent=1 // pred_check_branch
      %342 = sbr.rel (0) target = $region41
    $region40: #{tpu_custom_call.1} parent=1 // pred_region
      %s344 = ssub.s32 16, 16
      %345 = vsyncadd [#allocation4], %s344
      %s347 = sshll.u32 [#allocation3], 4
      %s348 = int_to_ptr.vmem [resolvable:$true] %s347
      %350 = dma.vmem_to_hbm [thread:$0]  %s348, 16, %s9, [#allocation4]
    $region41: #{tpu_custom_call.1} parent=1 // pred_fallthru
      _
    // Predicated region
    $region42: #{tpu_custom_call.1} parent=1 // pred_check
      _
    $region43: #{tpu_custom_call.1} parent=1 // pred_check_branch
      %352 = sbr.rel (0) target = $region45
    $region44: #{tpu_custom_call.1} parent=1 // pred_region
      %353 = dma.done [#allocation4], 16
    $region45: #{tpu_custom_call.1} parent=1 // pred_fallthru
      _
    %354 = vsyncpa [#allocation4], 1

</llo_original>
